<compile_context>
chip_gen: v6e
topology: v6e:2x2x1
jax: 0.10.0
libtpu: 0.0.40
codegen_flags: <defaults>
</compile_context>

<pallas_src>
import functools

import jax
import jax.numpy as jnp
from jax.experimental import pallas as pl
from jax.experimental.pallas import tpu as pltpu


def _layernorm_kernel(x_ref, a_ref, b_ref, o_ref, *, eps):
    # x_ref: (row_tile, F)   a_ref/b_ref: (1, F)   o_ref: (row_tile, F)
    x = x_ref[...].astype(jnp.float32)
    f = x.shape[-1]

    mean = jnp.mean(x, axis=-1, keepdims=True)
    diff = x - mean
    # torch.std default: unbiased estimator (divide by N-1).
    var = jnp.sum(diff * diff, axis=-1, keepdims=True) / (f - 1)
    std = jnp.sqrt(var)

    # Reciprocal on a (row_tile, 1) column instead of a full-width divide;
    # exact (approx=False) so the 1e-5 tolerance check holds.
    inv = pl.reciprocal(std + eps, approx=False)

    if o_ref.dtype == jnp.bfloat16:
        # v6e/v7x have bf16 VALU: do the full-width scale/shift at half width
        # (reductions above stayed in f32 for accuracy).
        xhat = (diff * inv).astype(jnp.bfloat16)
        o_ref[...] = (a_ref[...].astype(jnp.bfloat16) * xhat
                      + b_ref[...].astype(jnp.bfloat16))
    else:
        a = a_ref[...].astype(jnp.float32)
        b = b_ref[...].astype(jnp.float32)
        o_ref[...] = (a * (diff * inv) + b).astype(o_ref.dtype)


def _round_up(x, m):
    return ((x + m - 1) // m) * m


def _vmem_budget_bytes():
    """Per-generation (budget, vmem_limit) in bytes.

    budget bounds the tile accounting in _pick_row_tile; vmem_limit is passed
    to CompilerParams.  Defaults are safe on every generation (a 32 MiB limit
    is legal on v5e/v6e/v7x); when the physical VMEM can be queried and is
    128 MiB (v5e/v6e) we go bigger.  v7x (64 MiB physical per TC) stays at the
    32 MiB scoped default so double-buffering + compiler scratch keep headroom.
    """
    budget, limit = 24 * 1024 * 1024, 32 * 1024 * 1024
    try:
        cap = int(getattr(pltpu.get_tpu_info(), "vmem_capacity_bytes", 0))
        if cap >= 128 * 1024 * 1024:
            budget, limit = 48 * 1024 * 1024, 64 * 1024 * 1024
    except Exception:
        pass
    return budget, limit


def _pick_row_tile(rows, features, itemsize, budget_bytes):
    """Largest row tile that fits the VMEM budget, then shrunk (if the row
    count allows) so there are enough grid steps for megacore + pipelining."""
    sublane = 8 if itemsize >= 4 else 16  # bf16 packs 2 rows per sublane

    # Per tile row: double-buffered input + output tiles in the input dtype
    # (4 * itemsize) plus ~two live f32 (row_tile, F) temporaries in the body.
    bytes_per_row = features * (4 * itemsize + 2 * 4)
    tile = max(sublane, budget_bytes // max(1, bytes_per_row))
    tile = max(sublane, (tile // sublane) * sublane)

    # Never larger than the (sublane-rounded) problem itself.
    tile = min(tile, _round_up(rows, sublane))

    # Target >= 8 grid steps (>= 4 per TensorCore on v7x) when rows allow, so
    # both cores get work and the DMA double-buffer has iterations to overlap;
    # fall back to >= 2 steps for small row counts.
    if rows >= 8 * sublane:
        per_step = _round_up(pl.cdiv(rows, 8), sublane)
        tile = min(tile, per_step)
    elif rows >= 2 * sublane:
        per_step = _round_up(pl.cdiv(rows, 2), sublane)
        tile = min(tile, per_step)
    return max(sublane, tile)


def layer_norm(x, a_2, b_2, eps=1e-6, row_tile=None):
    """x: [..., F];  a_2, b_2: [F]."""
    orig_shape = x.shape
    features = orig_shape[-1]
    rows = 1
    for d in orig_shape[:-1]:
        rows *= d

    x2 = x.reshape(rows, features)
    a2 = a_2.reshape(1, features)
    b2 = b_2.reshape(1, features)

    budget, vmem_limit = _vmem_budget_bytes()
    if row_tile is None:
        row_tile = _pick_row_tile(rows, features,
                                  jnp.dtype(x.dtype).itemsize, budget)

    # Ragged last block: no padding/slicing round-trip.  Garbage rows in the
    # overhang compute garbage but their writes are masked by Pallas.
    grid = (pl.cdiv(rows, row_tile),)

    # NOTE: best throughput requires `features` to be a multiple of 128
    # (lane-dense stores); smaller F is still correct, just masked.
    out = pl.pallas_call(
        functools.partial(_layernorm_kernel, eps=eps),
        out_shape=jax.ShapeDtypeStruct((rows, features), x.dtype),
        grid_spec=pltpu.PrefetchScalarGridSpec(
            num_scalar_prefetch=0,
            grid=grid,
            in_specs=[
                pl.BlockSpec((row_tile, features), lambda i: (i, 0)),
                pl.BlockSpec((1, features), lambda i: (0, 0)),
                pl.BlockSpec((1, features), lambda i: (0, 0)),
            ],
            out_specs=pl.BlockSpec((row_tile, features), lambda i: (i, 0)),
        ),
        compiler_params=pltpu.CompilerParams(
            dimension_semantics=("parallel",),
            vmem_limit_bytes=vmem_limit,
        ),
    )(x2, a2, b2)

    return out.reshape(orig_shape)


def _reference(x, a_2, b_2, eps):
    features = x.shape[-1]
    mean = jnp.mean(x, axis=-1, keepdims=True)
    std = jnp.sqrt(jnp.sum((x - mean) ** 2, axis=-1, keepdims=True)
                   / (features - 1))
    return a_2 * (x - mean) / (std + eps) + b_2


if __name__ == "__main__":
    batch, seq, hidden = 2, 8, 32
    eps = 1e-6

    key = jax.random.PRNGKey(0)
    x = jax.random.normal(key, (batch, seq, hidden), dtype=jnp.float32)

    # Deterministic parameter init, matching LayerNorm.__init__:
    a_2 = jnp.ones((hidden,), dtype=jnp.float32)   # torch.ones(features)
    b_2 = jnp.zeros((hidden,), dtype=jnp.float32)  # torch.zeros(features)

    out = layer_norm(x, a_2, b_2, eps=eps)
    out = jax.block_until_ready(out)
    ref = _reference(x, a_2, b_2, eps)
    assert jnp.allclose(out, ref, atol=1e-5, rtol=1e-5), "mismatch vs reference"

    # Ragged-grid check (rows % row_tile != 0): 15 rows, forced row_tile=8
    # -> 2 grid steps, last block half-masked.  Confirms no garbage leaks
    # into valid rows now that the pad/slice path is gone.
    key2 = jax.random.PRNGKey(0)
    x_rag = jax.random.normal(key2, (3, 5, hidden), dtype=jnp.float32)
    out_rag = jax.block_until_ready(layer_norm(x_rag, a_2, b_2, eps=eps,
                                               row_tile=8))
    ref_rag = _reference(x_rag, a_2, b_2, eps)
    assert jnp.all(jnp.isfinite(out_rag)), "non-finite values in ragged output"
    assert jnp.allclose(out_rag, ref_rag, atol=1e-5, rtol=1e-5), \
        "mismatch vs reference (ragged last block)"

    print("KERNEL_OK")
</pallas_src>

<mosaic_0001>
module attributes {stable_mosaic.version = 11 : i64} {
  func.func @_layernorm_kernel(%arg0: i32, %arg1: memref<8x32xf32, #tpu.memory_space<vmem>>, %arg2: memref<1x32xf32, #tpu.memory_space<vmem>>, %arg3: memref<1x32xf32, #tpu.memory_space<vmem>>, %arg4: memref<8x32xf32, #tpu.memory_space<vmem>>) attributes {dimension_semantics = [#tpu.dimension_semantics<parallel>], iteration_bounds = array<i64: 2>, scalar_prefetch = 0 : i64, scratch_operands = 0 : i64, tpu.core_type = #tpu.core_type<tc>, window_params = [{transform_indices = @transform_0, window_bounds = array<i64: 8, 32>}, {pipeline_mode = #tpu.pipeline_mode<synchronous>, transform_indices = @transform_1, window_bounds = array<i64: 1, 32>}, {pipeline_mode = #tpu.pipeline_mode<synchronous>, transform_indices = @transform_2, window_bounds = array<i64: 1, 32>}, {transform_indices = @transform_3, window_bounds = array<i64: 8, 32>}]} {
    %c0 = arith.constant 0 : index
    %c0_0 = arith.constant 0 : index
    %0 = vector.load %arg1[%c0, %c0_0] : memref<8x32xf32, #tpu.memory_space<vmem>>, vector<8x32xf32>
    %cst = arith.constant dense<0.000000e+00> : vector<8xf32>
    %1 = vector.multi_reduction <add>, %0, %cst [1] : vector<8x32xf32> to vector<8xf32>
    %2 = vector.shape_cast %1 : vector<8xf32> to vector<8x1xf32>
    %cst_1 = arith.constant 3.200000e+01 : f32
    %3 = vector.broadcast %cst_1 : f32 to vector<8x1xf32>
    %4 = arith.divf %2, %3 : vector<8x1xf32>
    %5 = vector.broadcast %4 : vector<8x1xf32> to vector<8x32xf32>
    %6 = arith.subf %0, %5 : vector<8x32xf32>
    %7 = arith.mulf %6, %6 : vector<8x32xf32>
    %cst_2 = arith.constant dense<0.000000e+00> : vector<8xf32>
    %8 = vector.multi_reduction <add>, %7, %cst_2 [1] : vector<8x32xf32> to vector<8xf32>
    %9 = vector.shape_cast %8 : vector<8xf32> to vector<8x1xf32>
    %cst_3 = arith.constant 3.100000e+01 : f32
    %10 = vector.broadcast %cst_3 : f32 to vector<8x1xf32>
    %11 = arith.divf %9, %10 : vector<8x1xf32>
    %12 = math.sqrt %11 : vector<8x1xf32>
    %cst_4 = arith.constant 9.99999997E-7 : f32
    %13 = vector.broadcast %cst_4 : f32 to vector<8x1xf32>
    %14 = arith.addf %12, %13 : vector<8x1xf32>
    %15 = tpu.reciprocal %14 : vector<8x1xf32> -> vector<8x1xf32>
    %c0_5 = arith.constant 0 : index
    %c0_6 = arith.constant 0 : index
    %16 = vector.load %arg2[%c0_5, %c0_6] : memref<1x32xf32, #tpu.memory_space<vmem>>, vector<1x32xf32>
    %c0_7 = arith.constant 0 : index
    %c0_8 = arith.constant 0 : index
    %17 = vector.load %arg3[%c0_7, %c0_8] : memref<1x32xf32, #tpu.memory_space<vmem>>, vector<1x32xf32>
    %18 = vector.broadcast %15 : vector<8x1xf32> to vector<8x32xf32>
    %19 = arith.mulf %6, %18 : vector<8x32xf32>
    %20 = vector.broadcast %16 : vector<1x32xf32> to vector<8x32xf32>
    %21 = arith.mulf %20, %19 : vector<8x32xf32>
    %22 = vector.broadcast %17 : vector<1x32xf32> to vector<8x32xf32>
    %23 = arith.addf %21, %22 : vector<8x32xf32>
    %c0_9 = arith.constant 0 : index
    %c0_10 = arith.constant 0 : index
    %24 = vector.load %arg4[%c0_9, %c0_10] : memref<8x32xf32, #tpu.memory_space<vmem>>, vector<8x32xf32>
    tpu.vector_store %arg4[%c0_9, %c0_10], %23 {strides = array<i32>} : memref<8x32xf32, #tpu.memory_space<vmem>>, vector<8x32xf32>,
    return
  }
  func.func @transform_0(%arg0: i32) -> (i32, i32) {
    %c0_i32 = arith.constant 0 : i32
    %c0_i32_0 = arith.constant 0 : i32
    return %arg0, %c0_i32 : i32, i32
  }
  func.func @transform_1(%arg0: i32) -> (i32, i32) {
    %c0_i32 = arith.constant 0 : i32
    %c0_i32_0 = arith.constant 0 : i32
    %c0_i32_1 = arith.constant 0 : i32
    return %c0_i32, %c0_i32_0 : i32, i32
  }
  func.func @transform_2(%arg0: i32) -> (i32, i32) {
    %c0_i32 = arith.constant 0 : i32
    %c0_i32_0 = arith.constant 0 : i32
    %c0_i32_1 = arith.constant 0 : i32
    return %c0_i32, %c0_i32_0 : i32, i32
  }
  func.func @transform_3(%arg0: i32) -> (i32, i32) {
    %c0_i32 = arith.constant 0 : i32
    %c0_i32_0 = arith.constant 0 : i32
    return %arg0, %c0_i32 : i32, i32
  }
}

</mosaic_0001>

<llo_original>
// kernel: tpu_custom_call.1
$region0: #{tpu_custom_call.1}
  #allocation0 [shape = 'u32[]', space=smem, size = 0x4, offset = 0x4, fixed_abs, tag = 'smem constant byte address 0x4 - core index']
  #allocation1 [shape = 'u32[144,128]{1,0:T(1,128)}', space=vmem, size = 0x12000, scoped, tag = 'internal scratch']
  %s0 = inlined_call_operand.hbm [shape: f32[16,32], index: 0, kind: input, shape index: {}]
  %s1 = inlined_call_operand.vmem [shape: f32[1,32], index: 1, kind: input, shape index: {}]
  %s2 = inlined_call_operand.vmem [shape: f32[1,32], index: 2, kind: input, shape index: {}]
  %s3 = inlined_call_operand.hbm [shape: f32[16,32], index: 3, kind: output, shape index: {}]
  %s4 = sld [smem:[#allocation0]]
  $region49: #{tpu_custom_call.1} parent=0
    _
  %s6 = ssub.s32 1, %s4
  %s7 = scalar_select 0, %s6, %s4
  $region1: #{tpu_custom_call.1} parent=0
    #allocation2 [shape = 'u8[8192]{0}', space=vmem, size = 0x2000, scoped, tag = 'input window, operand 0']
    #allocation3 [shape = 's32[2]{0}', space=sflag, size = 0x8, scoped, tag = 'scoped memory for tpu_custom_call.1']
    #allocation4 [shape = 's32[2]{0}', space=sflag, size = 0x8, scoped, tag = 'scoped memory for tpu_custom_call.1']
    #allocation5 [shape = 'u8[8192]{0}', space=vmem, size = 0x2000, scoped, tag = 'output window, operand 0']
    %8 = vsyncpa [#allocation3], 0
    %s9 = scalar_lea.sflag [#allocation3], 1
    %10 = vsyncpa %s9, 0
    %11 = vsyncpa [#allocation4], 0
    %s12 = scalar_lea.sflag [#allocation4], 1
    %13 = vsyncpa %s12, 0
    loop: start=0, step=1, limit=4
    $region2: #{tpu_custom_call.1} parent=1 // loop_pre_header
      _
    $region3: #{tpu_custom_call.1} parent=1 // loop_header
      %s15 = sphi 0, %s19
      %p16 = scmp.ge.s32.totalorder %s15, 4
      %s25 = sphi 0, %s27
      %s28 = sphi 0, %s25
      %s29 = sphi 0, %s28
      %s45 = sphi 0, %s29
      %s49 = sphi 0, %s49
      %s51 = sphi 0, %s49
      %s52 = sphi 0, %s51
      %s66 = sphi 0, %s52
      %s70 = sphi 0, %s70
      %s72 = sphi 0, %s70
      %s73 = sphi 0, %s72
      %s87 = sphi 0, %s73
      %s93 = sphi 0, %s95
      %s96 = sphi 0, %s93
      %s97 = sphi 0, %s96
      %s113 = sphi 0, %s97
    $region4: #{tpu_custom_call.1} parent=1 // loop_header_branch
      %18 = sbr.rel (%p16) target = $region8
    $region5: #{tpu_custom_call.1} parent=1 // loop_body
      %s20 = ssub.s32 %s15, 1
      %s21 = ssub.s32 %s15, 2
      %s22 = sadd.s32 %s15, 1
      %s23 = ssub.s32 %s15, %s22
      %p24 = scmp.eq.s32.totalorder %s23, 0
      %s26 = sadd.s32 %s25, 1
      %s27 = scalar_select %p24, %s25, %s26
      %p30 = pneg %p24
      %p31 = scmp.eq.s32.totalorder %s15, 1
      %p32 = por %p30, %p31
      %p33 = scmp.ne.s32.totalorder %s25, %s28
      %p34 = scmp.eq.s32.totalorder %s15, 0
      %p35 = por %p33, %p34
      %p36 = scmp.ne.s32.totalorder %s25, %s28
      %p37 = scmp.eq.s32.totalorder %s20, 1
      %p38 = por %p36, %p37
      %p39 = scmp.ne.s32.totalorder %s28, %s29
      %p40 = scmp.eq.s32.totalorder %s20, 0
      %p41 = por %p39, %p40
      %p42 = scmp.ne.s32.totalorder %s28, %s29
      %p43 = scmp.eq.s32.totalorder %s21, 1
      %p44 = por %p42, %p43
      %p46 = scmp.ne.s32.totalorder %s29, %s45
      %p47 = scmp.eq.s32.totalorder %s21, 0
      %p48 = por %p46, %p47
      %s50 = sadd.s32 %s49, 1
      %p53 = scmp.eq.s32.totalorder %s15, 1
      %p54 = scmp.ne.s32.totalorder %s49, %s51
      %p55 = scmp.eq.s32.totalorder %s15, 0
      %p56 = por %p54, %p55
      %p57 = scmp.ne.s32.totalorder %s49, %s51
      %p58 = scmp.eq.s32.totalorder %s20, 1
      %p59 = por %p57, %p58
      %p60 = scmp.ne.s32.totalorder %s51, %s52
      %p61 = scmp.eq.s32.totalorder %s20, 0
      %p62 = por %p60, %p61
      %p63 = scmp.ne.s32.totalorder %s51, %s52
      %p64 = scmp.eq.s32.totalorder %s21, 1
      %p65 = por %p63, %p64
      %p67 = scmp.ne.s32.totalorder %s52, %s66
      %p68 = scmp.eq.s32.totalorder %s21, 0
      %p69 = por %p67, %p68
      %s71 = sadd.s32 %s70, 1
      %p74 = scmp.eq.s32.totalorder %s15, 1
      %p75 = scmp.ne.s32.totalorder %s70, %s72
      %p76 = scmp.eq.s32.totalorder %s15, 0
      %p77 = por %p75, %p76
      %p78 = scmp.ne.s32.totalorder %s70, %s72
      %p79 = scmp.eq.s32.totalorder %s20, 1
      %p80 = por %p78, %p79
      %p81 = scmp.ne.s32.totalorder %s72, %s73
      %p82 = scmp.eq.s32.totalorder %s20, 0
      %p83 = por %p81, %p82
      %p84 = scmp.ne.s32.totalorder %s72, %s73
      %p85 = scmp.eq.s32.totalorder %s21, 1
      %p86 = por %p84, %p85
      %p88 = scmp.ne.s32.totalorder %s73, %s87
      %p89 = scmp.eq.s32.totalorder %s21, 0
      %p90 = por %p88, %p89
      %s91 = ssub.s32 %s15, %s22
      %p92 = scmp.eq.s32.totalorder %s91, 0
      %s94 = sadd.s32 %s93, 1
      %s95 = scalar_select %p92, %s93, %s94
      %p98 = pneg %p92
      %p99 = scmp.eq.s32.totalorder %s15, 1
      %p100 = por %p98, %p99
      %p101 = scmp.ne.s32.totalorder %s93, %s96
      %p102 = scmp.eq.s32.totalorder %s15, 0
      %p103 = por %p101, %p102
      %p104 = scmp.ne.s32.totalorder %s93, %s96
      %p105 = scmp.eq.s32.totalorder %s20, 1
      %p106 = por %p104, %p105
      %p107 = scmp.ne.s32.totalorder %s96, %s97
      %p108 = scmp.eq.s32.totalorder %s20, 0
      %p109 = por %p107, %p108
      %p110 = scmp.ne.s32.totalorder %s96, %s97
      %p111 = scmp.eq.s32.totalorder %s21, 1
      %p112 = por %p110, %p111
      %p114 = scmp.ne.s32.totalorder %s97, %s113
      %p115 = scmp.eq.s32.totalorder %s21, 0
      %p116 = por %p114, %p115
      %p117 = scmp.le.s32.totalorder 1, %s15
      %p118 = scmp.lt.s32.totalorder %s15, 3
      %p119 = pnand %p117, %p118
      %p120 = pneg %p119
      // Predicated region
      $region9: #{tpu_custom_call.1} parent=5 // pred_check
        _
      $region10: #{tpu_custom_call.1} parent=5 // pred_check_branch
        %122 = sbr.rel (%p119) target = $region12
      $region11: #{tpu_custom_call.1} parent=5 // pred_region
        %s123 = ssub.s32 %s15, 1
        // Predicated region
        $region13: #{tpu_custom_call.1} parent=11 // pred_check
          %p124 = pneg %p62
        $region14: #{tpu_custom_call.1} parent=11 // pred_check_branch
          %126 = sbr.rel (%p124) target = $region16
        $region15: #{tpu_custom_call.1} parent=11 // pred_region
          _
        $region16: #{tpu_custom_call.1} parent=11 // pred_fallthru
          _
        // Predicated region
        $region17: #{tpu_custom_call.1} parent=11 // pred_check
          %p127 = pneg %p83
        $region18: #{tpu_custom_call.1} parent=11 // pred_check_branch
          %129 = sbr.rel (%p127) target = $region20
        $region19: #{tpu_custom_call.1} parent=11 // pred_region
          _
        $region20: #{tpu_custom_call.1} parent=11 // pred_fallthru
          _
      $region12: #{tpu_custom_call.1} parent=5 // pred_fallthru
        _
      %p130 = scmp.lt.s32.totalorder %s15, 2
      // Predicated region
      $region21: #{tpu_custom_call.1} parent=5 // pred_check
        %p131 = pneg %p130
      $region22: #{tpu_custom_call.1} parent=5 // pred_check_branch
        %133 = sbr.rel (%p131) target = $region24
      $region23: #{tpu_custom_call.1} parent=5 // pred_region
        // Predicated region
        $region25: #{tpu_custom_call.1} parent=23 // pred_check
          %p134 = pneg %p35
        $region26: #{tpu_custom_call.1} parent=23 // pred_check_branch
          %136 = sbr.rel (%p134) target = $region28
        $region27: #{tpu_custom_call.1} parent=23 // pred_region
          %s137 = sand.u32 %s25, 1
          %s138 = scalar_lea.sflag [#allocation3], %s137
          %s139 = sand.u32 %s25, 1
          %s140 = smul.addr %s139, 8
          %s141 = scalar_lea.vmem [#allocation2], %s140
          %s143 = ssub.s32 128, 128
          %144 = vsyncadd %s138, %s143
          %s145 = smul.addr %s15, 128
          %s146 = scalar_lea.hbm %s0, %s145
          %s148 = sshll.u32 %s141, 4
          %s149 = int_to_ptr.vmem [resolvable:$true] %s148
          %151 = dma.hbm_to_vmem [thread:$0]  %s146, 128, %s149, %s138
        $region28: #{tpu_custom_call.1} parent=23 // pred_fallthru
          _
      $region24: #{tpu_custom_call.1} parent=5 // pred_fallthru
        _
      %p152 = scmp.le.s32.totalorder 1, %s15
      %p153 = scmp.lt.s32.totalorder %s15, 3
      %p154 = pnand %p152, %p153
      %p155 = pneg %p154
      // Predicated region
      $region29: #{tpu_custom_call.1} parent=5 // pred_check
        _
      $region30: #{tpu_custom_call.1} parent=5 // pred_check_branch
        %157 = sbr.rel (%p154) target = $region32
      $region31: #{tpu_custom_call.1} parent=5 // pred_region
        %s158 = ssub.s32 %s15, 1
        %s159 = sand.u32 %s28, 1
        %s160 = scalar_lea.sflag [#allocation3], %s159
        %s161 = sand.u32 %s28, 1
        %s162 = smul.addr %s161, 8
        %s163 = scalar_lea.vmem [#allocation2], %s162
        // Predicated region
        $region33: #{tpu_custom_call.1} parent=31 // pred_check
          %p164 = pneg %p41
        $region34: #{tpu_custom_call.1} parent=31 // pred_check_branch
          %166 = sbr.rel (%p164) target = $region36
        $region35: #{tpu_custom_call.1} parent=31 // pred_region
          %167 = dma.done %s160, 128
        $region36: #{tpu_custom_call.1} parent=31 // pred_fallthru
          _
        %s168 = sand.u32 %s28, 1
        %s169 = scalar_lea.sflag [#allocation3], %s168
        %s170 = sand.u32 %s28, 1
        %s171 = smul.addr %s170, 8
        %s172 = scalar_lea.vmem [#allocation2], %s171
        %p173 = pneg %p41
        %p174 = pneg %p38
        %p175 = pneg %p62
        %p176 = pneg %p59
        %p177 = pneg %p83
        %p178 = pneg %p80
        %p179 = pneg %p109
        %p180 = pneg %p106
        %s181 = sand.u32 %s96, 1
        %s182 = scalar_lea.sflag [#allocation4], %s181
        %s183 = sand.u32 %s96, 1
        %s184 = smul.addr %s183, 8
        %s185 = scalar_lea.vmem [#allocation5], %s184
        %v186 = vld [vmem:[%s163] sm:$0xff]
        %vm187 = vcmask 261120
        %v188 = vsel %vm187, %v186, 0.0
        %189 = vadd.xlane.f32.xlu0 %v188
        %v190 = vpop.xlane.xlu0 %189
        %v191 = vrcp.pop 32.0
        %v192 = vmul.f32 %v190, %v191
        %v193 = vsub.f32 %v186, %v192
        %v194 = vmul.f32 %v193, %v193
        %v195 = vsel %vm187, %v194, 0.0
        %196 = vadd.xlane.f32.xlu0 %v195
        %v197 = vpop.xlane.xlu0 %196
        %v198 = vrcp.pop 31.0
        %v199 = vmul.f32 %v197, %v198
        %v200 = vrsqrt.pop %v199
        %v201 = vmul.f32 %v199, %v200
        %vm202 = vcmp.eq.f32.partialorder %v199, inf
        %v203 = vsel %vm202, %v199, %v201
        %vm204 = vcmp.eq.f32.partialorder %v199, 0.0
        %v205 = vand.u32 %v199, 2147483648
        %v206 = vsel %vm204, %v205, %v203
        %v207 = vadd.f32 %v206, 1e-06
        %v208 = vrcp.pop %v207
        %v209 = vld [vmem:[%s1] sm:$0x1]
        %v210 = vld [vmem:[%s2] sm:$0x1]
        %v211 = vmul.f32 %v193, %v208
        %v213 = vlaneseq
        %v214 = vshrl.u32 %v213, 7
        %v215 = vsub.s32 0, %v214
        %v216 = vrot.slane %v209, %v215
        %v218 = vmul.f32 %v216, %v211
        %v220 = vlaneseq
        %v221 = vshrl.u32 %v220, 7
        %v222 = vsub.s32 0, %v221
        %v223 = vrot.slane %v210, %v222
        %v225 = vadd.f32 %v218, %v223
        %226 = vst.msk [vmem:[%s185] sm:$0xff] %vm187, %v225
        %s227 = sand.u32 %s96, 1
        %s228 = scalar_lea.sflag [#allocation4], %s227
        %s229 = sand.u32 %s96, 1
        %s230 = smul.addr %s229, 8
        %s231 = scalar_lea.vmem [#allocation5], %s230
        // Predicated region
        $region37: #{tpu_custom_call.1} parent=31 // pred_check
          %p232 = pneg %p106
        $region38: #{tpu_custom_call.1} parent=31 // pred_check_branch
          %234 = sbr.rel (%p232) target = $region40
        $region39: #{tpu_custom_call.1} parent=31 // pred_region
          %s236 = ssub.s32 128, 128
          %237 = vsyncadd %s228, %s236
          %s238 = smul.addr %s20, 128
          %s239 = scalar_lea.hbm %s3, %s238
          %s241 = sshll.u32 %s231, 4
          %s242 = int_to_ptr.vmem [resolvable:$true] %s241
          %244 = dma.vmem_to_hbm [thread:$0]  %s242, 128, %s239, %s228
        $region40: #{tpu_custom_call.1} parent=31 // pred_fallthru
          _
      $region32: #{tpu_custom_call.1} parent=5 // pred_fallthru
        _
      %p245 = scmp.le.s32.totalorder 2, %s15
      // Predicated region
      $region41: #{tpu_custom_call.1} parent=5 // pred_check
        %p246 = pneg %p245
      $region42: #{tpu_custom_call.1} parent=5 // pred_check_branch
        %248 = sbr.rel (%p246) target = $region44
      $region43: #{tpu_custom_call.1} parent=5 // pred_region
        %s249 = ssub.s32 %s15, 2
        // Predicated region
        $region45: #{tpu_custom_call.1} parent=43 // pred_check
          %p250 = pneg %p112
        $region46: #{tpu_custom_call.1} parent=43 // pred_check_branch
          %252 = sbr.rel (%p250) target = $region48
        $region47: #{tpu_custom_call.1} parent=43 // pred_region
          %s253 = sand.u32 %s97, 1
          %s254 = scalar_lea.sflag [#allocation4], %s253
          %s255 = sand.u32 %s97, 1
          %s256 = smul.addr %s255, 8
          %s257 = scalar_lea.vmem [#allocation5], %s256
          %258 = dma.done %s254, 128
        $region48: #{tpu_custom_call.1} parent=43 // pred_fallthru
          _
      $region44: #{tpu_custom_call.1} parent=5 // pred_fallthru
        _
    $region6: #{tpu_custom_call.1} parent=1 // loop_footer
      %s19 = sadd.s32 1, %s15
    $region7: #{tpu_custom_call.1} parent=1 // loop_footer_branch
      %14 = sbr.rel target = $region3
    $region8: #{tpu_custom_call.1} parent=1 // loop_exit
      _
    %259 = vsyncpa [#allocation3], 1
    %s260 = scalar_lea.sflag [#allocation3], 1
    %261 = vsyncpa %s260, 1
    %262 = vsyncpa [#allocation4], 1
    %s263 = scalar_lea.sflag [#allocation4], 1
    %264 = vsyncpa %s263, 1

</llo_original>
